<compile_context>
chip_gen: v6e
topology: v6e:2x2x1
jax: 0.10.0
libtpu: 0.0.40
codegen_flags: <defaults>
</compile_context>

<pallas_src>
import functools

import jax
import jax.numpy as jnp
from jax.experimental import pallas as pl
from jax.experimental.pallas import tpu as pltpu

BN_EPS = 1e-5


def _round_up(x, m):
    return ((x + m - 1) // m) * m


def _punish_kernel(x_ref, w1_ref, b1_ref, w2_ref, b2_ref, wc_ref, bc_ref, out_ref):
    # ---- Linear(D_in, 512) + ReLU  (BN1 is folded into w2/b2) ----
    h1 = jnp.dot(x_ref[...], w1_ref[...], preferred_element_type=jnp.float32)
    h1 = jnp.maximum(h1 + b1_ref[...], 0.0)

    # ---- Linear(512, 256) (+BN1 fold) + ReLU  (BN2 is folded into wc/bc) ----
    h2 = jnp.dot(h1.astype(jnp.bfloat16), w2_ref[...], preferred_element_type=jnp.float32)
    h2 = jnp.maximum(h2 + b2_ref[...], 0.0)

    # ---- Combined Linear(256, D_out) and predict Linear(D_out, 2) in one lane-dense
    #      matmul: wc = [w3_folded | w3_folded @ wp | 0-padding], bc likewise ----
    out = jnp.dot(h2.astype(jnp.bfloat16), wc_ref[...], preferred_element_type=jnp.float32)
    out_ref[...] = (out + bc_ref[...]).astype(out_ref.dtype)


@functools.partial(jax.jit, static_argnames=("batch_tile",))
def punish_model_forward(x, params, batch_tile=256):
    """x: (B, D_in) float32. params: dict of f32 weights. Returns (punish_state, logits)."""
    B, D_in = x.shape
    H1 = params["w1"].shape[1]
    H2 = params["w2"].shape[1]
    D_out = params["w3"].shape[1]

    # ---- Fold BatchNorm (eval semantics) into the following Linear layer ----
    scale1 = params["bn1_gamma"] * jax.lax.rsqrt(params["bn1_var"] + BN_EPS)
    shift1 = params["bn1_beta"] - params["bn1_mean"] * scale1
    w2f = params["w2"] * scale1[:, None]
    b2f = shift1 @ params["w2"] + params["b2"]

    scale2 = params["bn2_gamma"] * jax.lax.rsqrt(params["bn2_var"] + BN_EPS)
    shift2 = params["bn2_beta"] - params["bn2_mean"] * scale2
    w3f = params["w3"] * scale2[:, None]
    b3f = shift2 @ params["w3"] + params["b3"]

    # ---- Fold predict_layer (Dropout is identity, no nonlinearity in between):
    #      logits = state @ wp + bp = h2 @ (w3f @ wp) + (b3f @ wp + bp) ----
    w3p = w3f @ params["wp"]
    b3p = b3f @ params["wp"] + params["bp"]

    # ---- One combined, lane-dense output [state | logits | zeros] ----
    N_out = D_out + 2
    N_pad = _round_up(N_out, 128)
    wc = jnp.zeros((H2, N_pad), jnp.float32)
    wc = wc.at[:, :D_out].set(w3f).at[:, D_out:N_out].set(w3p)
    bc = jnp.zeros((N_pad,), jnp.float32)
    bc = bc.at[:D_out].set(b3f).at[D_out:N_out].set(b3p)

    # ---- bf16 matmul operands (f32 accumulation in-kernel), f32 biases ----
    x_bf = x.astype(jnp.bfloat16)
    w1 = params["w1"].astype(jnp.bfloat16)
    w2 = w2f.astype(jnp.bfloat16)
    wc = wc.astype(jnp.bfloat16)
    b1 = params["b1"].reshape(1, H1)
    b2 = b2f.reshape(1, H2)
    bc = bc.reshape(1, N_pad)

    # ---- Batch tiling: big M per grid step; pad ragged / small batches ----
    bt = min(batch_tile, _round_up(B, 8))
    B_pad = _round_up(B, bt)
    if B_pad != B:
        x_bf = jnp.pad(x_bf, ((0, B_pad - B), (0, 0)))
    grid = (B_pad // bt,)

    out = pl.pallas_call(
        _punish_kernel,
        grid=grid,
        in_specs=[
            pl.BlockSpec((bt, D_in), lambda i: (i, 0)),      # x tile (streams)
            pl.BlockSpec((D_in, H1), lambda i: (0, 0)),      # w1 (grid-invariant)
            pl.BlockSpec((1, H1), lambda i: (0, 0)),         # b1
            pl.BlockSpec((H1, H2), lambda i: (0, 0)),        # w2 (BN1 folded)
            pl.BlockSpec((1, H2), lambda i: (0, 0)),         # b2 (BN1 folded)
            pl.BlockSpec((H2, N_pad), lambda i: (0, 0)),     # [w3 | w3@wp] padded
            pl.BlockSpec((1, N_pad), lambda i: (0, 0)),      # [b3 | b3@wp+bp] padded
        ],
        out_specs=pl.BlockSpec((bt, N_pad), lambda i: (i, 0)),
        out_shape=jax.ShapeDtypeStruct((B_pad, N_pad), jnp.float32),
        compiler_params=pltpu.CompilerParams(
            dimension_semantics=("parallel",),
            vmem_limit_bytes=64 * 1024 * 1024,
        ),
    )(x_bf, w1, b1, w2, b2, wc, bc)

    punish_state = out[:B, :D_out]
    logits = out[:B, D_out:D_out + 2]
    return punish_state, logits


def init_params(key, input_dim, output_dim):
    """Deterministic init mimicking PyTorch nn.Linear defaults (U(-1/sqrt(fan_in), ...))."""
    ks = jax.random.split(key, 8)

    def linear(kw, kb, fan_in, fan_out):
        bound = 1.0 / jnp.sqrt(fan_in)
        w = jax.random.uniform(kw, (fan_in, fan_out), jnp.float32, -bound, bound)
        b = jax.random.uniform(kb, (fan_out,), jnp.float32, -bound, bound)
        return w, b

    w1, b1 = linear(ks[0], ks[1], input_dim, 512)
    w2, b2 = linear(ks[2], ks[3], 512, 256)
    w3, b3 = linear(ks[4], ks[5], 256, output_dim)
    wp, bp = linear(ks[6], ks[7], output_dim, 2)

    return {
        "w1": w1, "b1": b1,
        "bn1_gamma": jnp.ones((512,), jnp.float32),
        "bn1_beta": jnp.zeros((512,), jnp.float32),
        "bn1_mean": jnp.zeros((512,), jnp.float32),
        "bn1_var": jnp.ones((512,), jnp.float32),
        "w2": w2, "b2": b2,
        "bn2_gamma": jnp.ones((256,), jnp.float32),
        "bn2_beta": jnp.zeros((256,), jnp.float32),
        "bn2_mean": jnp.zeros((256,), jnp.float32),
        "bn2_var": jnp.ones((256,), jnp.float32),
        "w3": w3, "b3": b3,
        "wp": wp, "bp": bp,
    }


def reference_forward(x, p):
    """Pure-JAX f32 reference with the original (unfolded) eval-mode structure."""
    h = jnp.maximum(x @ p["w1"] + p["b1"], 0.0)
    h = (h - p["bn1_mean"]) * p["bn1_gamma"] / jnp.sqrt(p["bn1_var"] + BN_EPS) + p["bn1_beta"]
    h = jnp.maximum(h @ p["w2"] + p["b2"], 0.0)
    h = (h - p["bn2_mean"]) * p["bn2_gamma"] / jnp.sqrt(p["bn2_var"] + BN_EPS) + p["bn2_beta"]
    state = h @ p["w3"] + p["b3"]
    logits = state @ p["wp"] + p["bp"]
    return state, logits


if __name__ == "__main__":
    key = jax.random.PRNGKey(0)
    k_x, k_p = jax.random.split(key)

    batch, input_dim, output_dim = 8, 32, 16
    x = jax.random.normal(k_x, (batch, input_dim), jnp.float32)
    params = init_params(k_p, input_dim, output_dim)

    state, logits = punish_model_forward(x, params)
    state, logits = jax.block_until_ready((state, logits))

    ref_state, ref_logits = reference_forward(x, params)
    assert state.shape == (batch, output_dim)
    assert logits.shape == (batch, 2)
    # bf16 matmul operands (f32 accumulation) -> loose tolerance vs. the pure-f32 reference.
    assert jnp.allclose(state, ref_state, atol=5e-2, rtol=5e-2)
    assert jnp.allclose(logits, ref_logits, atol=5e-2, rtol=5e-2)

    print("KERNEL_OK")
</pallas_src>

<mosaic_0001>
module attributes {stable_mosaic.version = 11 : i64} {
  func.func @_punish_kernel(%arg0: i32, %arg1: memref<8x32xbf16, #tpu.memory_space<vmem>>, %arg2: memref<32x512xbf16, #tpu.memory_space<vmem>>, %arg3: memref<1x512xf32, #tpu.memory_space<vmem>>, %arg4: memref<512x256xbf16, #tpu.memory_space<vmem>>, %arg5: memref<1x256xf32, #tpu.memory_space<vmem>>, %arg6: memref<256x128xbf16, #tpu.memory_space<vmem>>, %arg7: memref<1x128xf32, #tpu.memory_space<vmem>>, %arg8: memref<8x128xf32, #tpu.memory_space<vmem>>) attributes {dimension_semantics = [#tpu.dimension_semantics<parallel>], iteration_bounds = array<i64: 1>, scalar_prefetch = 0 : i64, scratch_operands = 0 : i64, tpu.core_type = #tpu.core_type<tc>, window_params = [{transform_indices = @transform_0, window_bounds = array<i64: 8, 32>}, {pipeline_mode = #tpu.pipeline_mode<synchronous>, transform_indices = @transform_1, window_bounds = array<i64: 32, 512>}, {pipeline_mode = #tpu.pipeline_mode<synchronous>, transform_indices = @transform_2, window_bounds = array<i64: 1, 512>}, {pipeline_mode = #tpu.pipeline_mode<synchronous>, transform_indices = @transform_3, window_bounds = array<i64: 512, 256>}, {pipeline_mode = #tpu.pipeline_mode<synchronous>, transform_indices = @transform_4, window_bounds = array<i64: 1, 256>}, {pipeline_mode = #tpu.pipeline_mode<synchronous>, transform_indices = @transform_5, window_bounds = array<i64: 256, 128>}, {pipeline_mode = #tpu.pipeline_mode<synchronous>, transform_indices = @transform_6, window_bounds = array<i64: 1, 128>}, {transform_indices = @transform_7, window_bounds = array<i64: 8, 128>}]} {
    %c0 = arith.constant 0 : index
    %c0_0 = arith.constant 0 : index
    %0 = vector.load %arg1[%c0, %c0_0] : memref<8x32xbf16, #tpu.memory_space<vmem>>, vector<8x32xbf16>
    %c0_1 = arith.constant 0 : index
    %c0_2 = arith.constant 0 : index
    %1 = vector.load %arg2[%c0_1, %c0_2] : memref<32x512xbf16, #tpu.memory_space<vmem>>, vector<32x512xbf16>
    %cst = arith.constant dense<0.000000e+00> : vector<8x512xf32>
    %2 = tpu.matmul %0, %1, %cst {dimension_numbers = #tpu.dot_dimension_numbers<[1], [0], [0], [1], [0, 0, 1, 1], [], []>} : vector<8x32xbf16>, vector<32x512xbf16>, vector<8x512xf32> -> vector<8x512xf32>
    %c0_3 = arith.constant 0 : index
    %c0_4 = arith.constant 0 : index
    %3 = vector.load %arg3[%c0_3, %c0_4] : memref<1x512xf32, #tpu.memory_space<vmem>>, vector<1x512xf32>
    %4 = vector.broadcast %3 : vector<1x512xf32> to vector<8x512xf32>
    %5 = arith.addf %2, %4 : vector<8x512xf32>
    %cst_5 = arith.constant 0.000000e+00 : f32
    %6 = vector.broadcast %cst_5 : f32 to vector<8x512xf32>
    %7 = arith.maximumf %5, %6 : vector<8x512xf32>
    %8 = arith.truncf %7 : vector<8x512xf32> to vector<8x512xbf16>
    %c0_6 = arith.constant 0 : index
    %c0_7 = arith.constant 0 : index
    %9 = vector.load %arg4[%c0_6, %c0_7] : memref<512x256xbf16, #tpu.memory_space<vmem>>, vector<512x256xbf16>
    %cst_8 = arith.constant dense<0.000000e+00> : vector<8x256xf32>
    %10 = tpu.matmul %8, %9, %cst_8 {dimension_numbers = #tpu.dot_dimension_numbers<[1], [0], [0], [1], [0, 0, 1, 1], [], []>} : vector<8x512xbf16>, vector<512x256xbf16>, vector<8x256xf32> -> vector<8x256xf32>
    %c0_9 = arith.constant 0 : index
    %c0_10 = arith.constant 0 : index
    %11 = vector.load %arg5[%c0_9, %c0_10] : memref<1x256xf32, #tpu.memory_space<vmem>>, vector<1x256xf32>
    %12 = vector.broadcast %11 : vector<1x256xf32> to vector<8x256xf32>
    %13 = arith.addf %10, %12 : vector<8x256xf32>
    %cst_11 = arith.constant 0.000000e+00 : f32
    %14 = vector.broadcast %cst_11 : f32 to vector<8x256xf32>
    %15 = arith.maximumf %13, %14 : vector<8x256xf32>
    %16 = arith.truncf %15 : vector<8x256xf32> to vector<8x256xbf16>
    %c0_12 = arith.constant 0 : index
    %c0_13 = arith.constant 0 : index
    %17 = vector.load %arg6[%c0_12, %c0_13] : memref<256x128xbf16, #tpu.memory_space<vmem>>, vector<256x128xbf16>
    %cst_14 = arith.constant dense<0.000000e+00> : vector<8x128xf32>
    %18 = tpu.matmul %16, %17, %cst_14 {dimension_numbers = #tpu.dot_dimension_numbers<[1], [0], [0], [1], [0, 0, 1, 1], [], []>} : vector<8x256xbf16>, vector<256x128xbf16>, vector<8x128xf32> -> vector<8x128xf32>
    %c0_15 = arith.constant 0 : index
    %c0_16 = arith.constant 0 : index
    %19 = vector.load %arg7[%c0_15, %c0_16] : memref<1x128xf32, #tpu.memory_space<vmem>>, vector<1x128xf32>
    %20 = vector.broadcast %19 : vector<1x128xf32> to vector<8x128xf32>
    %21 = arith.addf %18, %20 : vector<8x128xf32>
    %c0_17 = arith.constant 0 : index
    %c0_18 = arith.constant 0 : index
    %22 = vector.load %arg8[%c0_17, %c0_18] : memref<8x128xf32, #tpu.memory_space<vmem>>, vector<8x128xf32>
    tpu.vector_store %arg8[%c0_17, %c0_18], %21 {strides = array<i32>} : memref<8x128xf32, #tpu.memory_space<vmem>>, vector<8x128xf32>,
    return
  }
  func.func @transform_0(%arg0: i32) -> (i32, i32) {
    %c0_i32 = arith.constant 0 : i32
    %c0_i32_0 = arith.constant 0 : i32
    return %arg0, %c0_i32 : i32, i32
  }
  func.func @transform_1(%arg0: i32) -> (i32, i32) {
    %c0_i32 = arith.constant 0 : i32
    %c0_i32_0 = arith.constant 0 : i32
    %c0_i32_1 = arith.constant 0 : i32
    return %c0_i32, %c0_i32_0 : i32, i32
  }
  func.func @transform_2(%arg0: i32) -> (i32, i32) {
    %c0_i32 = arith.constant 0 : i32
    %c0_i32_0 = arith.constant 0 : i32
    %c0_i32_1 = arith.constant 0 : i32
    return %c0_i32, %c0_i32_0 : i32, i32
  }
  func.func @transform_3(%arg0: i32) -> (i32, i32) {
    %c0_i32 = arith.constant 0 : i32
    %c0_i32_0 = arith.constant 0 : i32
    %c0_i32_1 = arith.constant 0 : i32
    return %c0_i32, %c0_i32_0 : i32, i32
  }
  func.func @transform_4(%arg0: i32) -> (i32, i32) {
    %c0_i32 = arith.constant 0 : i32
    %c0_i32_0 = arith.constant 0 : i32
    %c0_i32_1 = arith.constant 0 : i32
    return %c0_i32, %c0_i32_0 : i32, i32
  }
  func.func @transform_5(%arg0: i32) -> (i32, i32) {
    %c0_i32 = arith.constant 0 : i32
    %c0_i32_0 = arith.constant 0 : i32
    %c0_i32_1 = arith.constant 0 : i32
    return %c0_i32, %c0_i32_0 : i32, i32
  }
  func.func @transform_6(%arg0: i32) -> (i32, i32) {
    %c0_i32 = arith.constant 0 : i32
    %c0_i32_0 = arith.constant 0 : i32
    %c0_i32_1 = arith.constant 0 : i32
    return %c0_i32, %c0_i32_0 : i32, i32
  }
  func.func @transform_7(%arg0: i32) -> (i32, i32) {
    %c0_i32 = arith.constant 0 : i32
    %c0_i32_0 = arith.constant 0 : i32
    return %arg0, %c0_i32 : i32, i32
  }
}

</mosaic_0001>

<llo_original>
// kernel: punish_model_forward.1
$region0: #{punish_model_forward.1}
  #allocation0 [shape = 'u32[]', space=smem, size = 0x4, offset = 0x4, fixed_abs, tag = 'smem constant byte address 0x4 - core index']
  #allocation1 [shape = 'u32[144,128]{1,0:T(1,128)}', space=vmem, size = 0x12000, scoped, tag = 'internal scratch']
  %s0 = inlined_call_operand.vmem [shape: bf16[8,32], index: 0, kind: input, shape index: {}]
  %s1 = inlined_call_operand.vmem [shape: bf16[32,512], index: 1, kind: input, shape index: {}]
  %s2 = inlined_call_operand.vmem [shape: f32[1,512], index: 2, kind: input, shape index: {}]
  %s3 = inlined_call_operand.vmem [shape: bf16[512,256], index: 3, kind: input, shape index: {}]
  %s4 = inlined_call_operand.vmem [shape: f32[1,256], index: 4, kind: input, shape index: {}]
  %s5 = inlined_call_operand.vmem [shape: bf16[256,128], index: 5, kind: input, shape index: {}]
  %s6 = inlined_call_operand.vmem [shape: f32[1,128], index: 6, kind: input, shape index: {}]
  %s7 = inlined_call_operand.vmem [shape: f32[8,128], index: 7, kind: output, shape index: {}]
  %s8 = sld [smem:[#allocation0]]
  $region38: #{punish_model_forward.1} parent=0
    _
  %s10 = ssub.s32 1, %s8
  %s11 = scalar_select 0, %s10, %s8
  // Predicated region
  $region2: #{punish_model_forward.1} parent=0 // pred_check
    _
  $region3: #{punish_model_forward.1} parent=0 // pred_check_branch
    %13 = sbr.rel (0) target = $region5
  $region4: #{punish_model_forward.1} parent=0 // pred_region
    _
  $region5: #{punish_model_forward.1} parent=0 // pred_fallthru
    _
  // Predicated region
  $region6: #{punish_model_forward.1} parent=0 // pred_check
    _
  $region7: #{punish_model_forward.1} parent=0 // pred_check_branch
    %15 = sbr.rel (0) target = $region9
  $region8: #{punish_model_forward.1} parent=0 // pred_region
    _
  $region9: #{punish_model_forward.1} parent=0 // pred_fallthru
    _
  // Predicated region
  $region10: #{punish_model_forward.1} parent=0 // pred_check
    _
  $region11: #{punish_model_forward.1} parent=0 // pred_check_branch
    %17 = sbr.rel (0) target = $region13
  $region12: #{punish_model_forward.1} parent=0 // pred_region
    _
  $region13: #{punish_model_forward.1} parent=0 // pred_fallthru
    _
  // Predicated region
  $region14: #{punish_model_forward.1} parent=0 // pred_check
    _
  $region15: #{punish_model_forward.1} parent=0 // pred_check_branch
    %19 = sbr.rel (0) target = $region17
  $region16: #{punish_model_forward.1} parent=0 // pred_region
    _
  $region17: #{punish_model_forward.1} parent=0 // pred_fallthru
    _
  // Predicated region
  $region18: #{punish_model_forward.1} parent=0 // pred_check
    _
  $region19: #{punish_model_forward.1} parent=0 // pred_check_branch
    %21 = sbr.rel (0) target = $region21
  $region20: #{punish_model_forward.1} parent=0 // pred_region
    _
  $region21: #{punish_model_forward.1} parent=0 // pred_fallthru
    _
  // Predicated region
  $region22: #{punish_model_forward.1} parent=0 // pred_check
    _
  $region23: #{punish_model_forward.1} parent=0 // pred_check_branch
    %23 = sbr.rel (0) target = $region25
  $region24: #{punish_model_forward.1} parent=0 // pred_region
    _
  $region25: #{punish_model_forward.1} parent=0 // pred_fallthru
    _
  // Predicated region
  $region26: #{punish_model_forward.1} parent=0 // pred_check
    _
  $region27: #{punish_model_forward.1} parent=0 // pred_check_branch
    %25 = sbr.rel (0) target = $region29
  $region28: #{punish_model_forward.1} parent=0 // pred_region
    _
  $region29: #{punish_model_forward.1} parent=0 // pred_fallthru
    _
  %v27 = vld [vmem:[%s0] sm:$0xf]
  %v28 = vld [vmem:[%s1] sm:$0xff]
  %v29 = vld [vmem:[%s1 + $0x8] sm:$0xff]
  %v30 = vld [vmem:[%s1 + $0x10] sm:$0xff]
  %v31 = vld [vmem:[%s1 + $0x18] sm:$0xff]
  %v32 = vld [vmem:[%s1 + $0x20] sm:$0xff]
  %v33 = vld [vmem:[%s1 + $0x28] sm:$0xff]
  %v34 = vld [vmem:[%s1 + $0x30] sm:$0xff]
  %v35 = vld [vmem:[%s1 + $0x38] sm:$0xff]
  %v36 = vld [vmem:[%s2] sm:$0xf]
  %v38 = vlaneseq
  %v39 = vshrl.u32 %v38, 7
  %v40 = vsub.s32 0, %v39
  %v41 = vrot.slane %v36, %v40
  %v42 = vlaneseq
  %v43 = vshrl.u32 %v42, 7
  %v44 = vsub.s32 1, %v43
  %v45 = vrot.slane %v36, %v44
  %v46 = vlaneseq
  %v47 = vshrl.u32 %v46, 7
  %v48 = vsub.s32 2, %v47
  %v49 = vrot.slane %v36, %v48
  %v50 = vlaneseq
  %v51 = vshrl.u32 %v50, 7
  %v52 = vsub.s32 3, %v51
  %v53 = vrot.slane %v36, %v52
  %v66 = vunpack.c.l.b16 %v28
  %v67 = vunpack.c.h.b16 %v28
  %v68 = vunpack.c.l.b16 %v29
  %v69 = vunpack.c.h.b16 %v29
  %v70 = vunpack.c.l.b16 %v30
  %v71 = vunpack.c.h.b16 %v30
  %v72 = vunpack.c.l.b16 %v31
  %v73 = vunpack.c.h.b16 %v31
  %v74 = vunpack.c.l.b16 %v32
  %v75 = vunpack.c.h.b16 %v32
  %v76 = vunpack.c.l.b16 %v33
  %v77 = vunpack.c.h.b16 %v33
  %v78 = vunpack.c.l.b16 %v34
  %v79 = vunpack.c.h.b16 %v34
  %v80 = vunpack.c.l.b16 %v35
  %v81 = vunpack.c.h.b16 %v35
  %v82 = vpack.c.b16 %v70, %v66
  %v83 = vpack.c.b16 %v71, %v67
  %v84 = vpack.c.b16 %v72, %v68
  %v85 = vpack.c.b16 %v73, %v69
  %v86 = vpack.c.b16 %v78, %v74
  %v87 = vpack.c.b16 %v79, %v75
  %v88 = vpack.c.b16 %v80, %v76
  %v89 = vpack.c.b16 %v81, %v77
  %vm98 = vcmask 261120
  %v100 = vsel %vm98, %v27, 0
  %102 = vmatprep.subr.bf16.mxu0 0
  %103 = vmatpush1.bf16.msra.mxu0 0
  %104 = vmatprep.subr.bf16.mxu0 0
  %105 = vmatpush1.bf16.msra.mxu0 0
  %106 = vmatprep.subr.bf16.mxu0 0
  %107 = vmatpush1.bf16.msra.mxu0 0
  %108 = vmatprep.subr.bf16.mxu0 0
  %109 = vmatpush1.bf16.msra.mxu0 0
  %110 = vmatprep.subr.bf16.mxu0 0
  %111 = vmatpush1.bf16.msra.mxu0 0
  %112 = vmatprep.subr.bf16.mxu0 0
  %113 = vmatpush1.bf16.msra.mxu0 0
  %114 = vmatprep.subr.bf16.mxu0 %v87
  %115 = vmatpush1.bf16.msra.mxu0 %v86
  %116 = vmatprep.subr.bf16.mxu0 %v83
  %117 = vmatpush1.bf16.msra.mxu0 %v82
  %118 = vmatprep.subr.bf16.mxu0 0
  %119 = vmatpush2.bf16.msra.mxu0 0
  %120 = vmatprep.subr.bf16.mxu0 0
  %121 = vmatpush2.bf16.msra.mxu0 0
  %122 = vmatprep.subr.bf16.mxu0 0
  %123 = vmatpush2.bf16.msra.mxu0 0
  %124 = vmatprep.subr.bf16.mxu0 0
  %125 = vmatpush2.bf16.msra.mxu0 0
  %126 = vmatprep.subr.bf16.mxu0 0
  %127 = vmatpush2.bf16.msra.mxu0 0
  %128 = vmatprep.subr.bf16.mxu0 0
  %129 = vmatpush2.bf16.msra.mxu0 0
  %130 = vmatprep.subr.bf16.mxu0 0
  %131 = vmatpush2.bf16.msra.mxu0 0
  %132 = vmatprep.subr.bf16.mxu0 0
  %133 = vmatpush2.bf16.msra.mxu0 0
  %134 = vmatprep.mubr.bf16.mxu0 0
  %135 = vmatmul.mubr.bf16.gmra.mxu0 %v100
  %v136 = vpop.f32.mrf.mxu0
  %v137 = vadd.f32 %v41, %v136
  %v138 = vpop.f32.mrf.mxu0
  %v139 = vadd.f32 %v45, %v138
  %v140 = vpop.f32.mrf.mxu0
  %v141 = vpop.f32.mrf.mxu0
  %142 = vdwg.mxu0
  %143 = vmatprep.subr.bf16.mxu0 0
  %144 = vmatpush1.bf16.msra.mxu0 0
  %145 = vmatprep.subr.bf16.mxu0 0
  %146 = vmatpush1.bf16.msra.mxu0 0
  %147 = vmatprep.subr.bf16.mxu0 0
  %148 = vmatpush1.bf16.msra.mxu0 0
  %149 = vmatprep.subr.bf16.mxu0 0
  %150 = vmatpush1.bf16.msra.mxu0 0
  %151 = vmatprep.subr.bf16.mxu0 0
  %152 = vmatpush1.bf16.msra.mxu0 0
  %153 = vmatprep.subr.bf16.mxu0 0
  %154 = vmatpush1.bf16.msra.mxu0 0
  %155 = vmatprep.subr.bf16.mxu0 %v89
  %156 = vmatpush1.bf16.msra.mxu0 %v88
  %157 = vmatprep.subr.bf16.mxu0 %v85
  %158 = vmatpush1.bf16.msra.mxu0 %v84
  %159 = vmatprep.subr.bf16.mxu0 0
  %160 = vmatpush2.bf16.msra.mxu0 0
  %161 = vmatprep.subr.bf16.mxu0 0
  %162 = vmatpush2.bf16.msra.mxu0 0
  %163 = vmatprep.subr.bf16.mxu0 0
  %164 = vmatpush2.bf16.msra.mxu0 0
  %165 = vmatprep.subr.bf16.mxu0 0
  %166 = vmatpush2.bf16.msra.mxu0 0
  %167 = vmatprep.subr.bf16.mxu0 0
  %168 = vmatpush2.bf16.msra.mxu0 0
  %169 = vmatprep.subr.bf16.mxu0 0
  %170 = vmatpush2.bf16.msra.mxu0 0
  %171 = vmatprep.subr.bf16.mxu0 0
  %172 = vmatpush2.bf16.msra.mxu0 0
  %173 = vmatprep.subr.bf16.mxu0 0
  %174 = vmatpush2.bf16.msra.mxu0 0
  %175 = vmatprep.mubr.bf16.mxu0 0
  %176 = vmatmul.mubr.bf16.gmra.mxu0 %v100
  %v177 = vpop.f32.mrf.mxu0
  %v178 = vadd.f32 %v49, %v177
  %v179 = vpop.f32.mrf.mxu0
  %v180 = vadd.f32 %v53, %v179
  %v181 = vpop.f32.mrf.mxu0
  %v182 = vpop.f32.mrf.mxu0
  %183 = vdwg.mxu0
  %v184 = vmax.f32 %v137, 0.0
  %v185 = vmax.f32 %v139, 0.0
  %v186 = vmax.f32 %v178, 0.0
  %v187 = vmax.f32 %v180, 0.0
  %v188 = vpack.c.bf16 %v184, %v184
  %v189 = vpack.c.bf16 %v185, %v185
  %v190 = vpack.c.bf16 %v186, %v186
  %v191 = vpack.c.bf16 %v187, %v187
  %v192 = vld [vmem:[%s3] sm:$0xff]
  %v193 = vld [vmem:[%s3 + $0x8] sm:$0xff]
  %v194 = vld [vmem:[%s3 + $0x10] sm:$0xff]
  %v195 = vld [vmem:[%s3 + $0x18] sm:$0xff]
  %v196 = vld [vmem:[%s3 + $0x20] sm:$0xff]
  %v197 = vld [vmem:[%s3 + $0x28] sm:$0xff]
  %v198 = vld [vmem:[%s3 + $0x30] sm:$0xff]
  %v199 = vld [vmem:[%s3 + $0x38] sm:$0xff]
  %v200 = vld [vmem:[%s3 + $0x40] sm:$0xff]
  %v201 = vld [vmem:[%s3 + $0x48] sm:$0xff]
  %v202 = vld [vmem:[%s3 + $0x50] sm:$0xff]
  %v203 = vld [vmem:[%s3 + $0x58] sm:$0xff]
  %v204 = vld [vmem:[%s3 + $0x60] sm:$0xff]
  %v205 = vld [vmem:[%s3 + $0x68] sm:$0xff]
  %v206 = vld [vmem:[%s3 + $0x70] sm:$0xff]
  %v207 = vld [vmem:[%s3 + $0x78] sm:$0xff]
  %v208 = vld [vmem:[%s3 + $0x80] sm:$0xff]
  %v209 = vld [vmem:[%s3 + $0x88] sm:$0xff]
  %v210 = vld [vmem:[%s3 + $0x90] sm:$0xff]
  %v211 = vld [vmem:[%s3 + $0x98] sm:$0xff]
  %v212 = vld [vmem:[%s3 + $0xa0] sm:$0xff]
  %v213 = vld [vmem:[%s3 + $0xa8] sm:$0xff]
  %v214 = vld [vmem:[%s3 + $0xb0] sm:$0xff]
  %v215 = vld [vmem:[%s3 + $0xb8] sm:$0xff]
  %v216 = vld [vmem:[%s3 + $0xc0] sm:$0xff]
  %v217 = vld [vmem:[%s3 + $0xc8] sm:$0xff]
  %v218 = vld [vmem:[%s3 + $0xd0] sm:$0xff]
  %v219 = vld [vmem:[%s3 + $0xd8] sm:$0xff]
  %v220 = vld [vmem:[%s3 + $0xe0] sm:$0xff]
  %v221 = vld [vmem:[%s3 + $0xe8] sm:$0xff]
  %v222 = vld [vmem:[%s3 + $0xf0] sm:$0xff]
  %v223 = vld [vmem:[%s3 + $0xf8] sm:$0xff]
  %v224 = vld [vmem:[%s3 + $0x100] sm:$0xff]
  %v225 = vld [vmem:[%s3 + $0x108] sm:$0xff]
  %v226 = vld [vmem:[%s3 + $0x110] sm:$0xff]
  %v227 = vld [vmem:[%s3 + $0x118] sm:$0xff]
  %v228 = vld [vmem:[%s3 + $0x120] sm:$0xff]
  %v229 = vld [vmem:[%s3 + $0x128] sm:$0xff]
  %v230 = vld [vmem:[%s3 + $0x130] sm:$0xff]
  %v231 = vld [vmem:[%s3 + $0x138] sm:$0xff]
  %v232 = vld [vmem:[%s3 + $0x140] sm:$0xff]
  %v233 = vld [vmem:[%s3 + $0x148] sm:$0xff]
  %v234 = vld [vmem:[%s3 + $0x150] sm:$0xff]
  %v235 = vld [vmem:[%s3 + $0x158] sm:$0xff]
  %v236 = vld [vmem:[%s3 + $0x160] sm:$0xff]
  %v237 = vld [vmem:[%s3 + $0x168] sm:$0xff]
  %v238 = vld [vmem:[%s3 + $0x170] sm:$0xff]
  %v239 = vld [vmem:[%s3 + $0x178] sm:$0xff]
  %v240 = vld [vmem:[%s3 + $0x180] sm:$0xff]
  %v241 = vld [vmem:[%s3 + $0x188] sm:$0xff]
  %v242 = vld [vmem:[%s3 + $0x190] sm:$0xff]
  %v243 = vld [vmem:[%s3 + $0x198] sm:$0xff]
  %v244 = vld [vmem:[%s3 + $0x1a0] sm:$0xff]
  %v245 = vld [vmem:[%s3 + $0x1a8] sm:$0xff]
  %v246 = vld [vmem:[%s3 + $0x1b0] sm:$0xff]
  %v247 = vld [vmem:[%s3 + $0x1b8] sm:$0xff]
  %v248 = vld [vmem:[%s3 + $0x1c0] sm:$0xff]
  %v249 = vld [vmem:[%s3 + $0x1c8] sm:$0xff]
  %v250 = vld [vmem:[%s3 + $0x1d0] sm:$0xff]
  %v251 = vld [vmem:[%s3 + $0x1d8] sm:$0xff]
  %v252 = vld [vmem:[%s3 + $0x1e0] sm:$0xff]
  %v253 = vld [vmem:[%s3 + $0x1e8] sm:$0xff]
  %v254 = vld [vmem:[%s3 + $0x1f0] sm:$0xff]
  %v255 = vld [vmem:[%s3 + $0x1f8] sm:$0xff]
  %v256 = vld [vmem:[%s4] sm:$0x3]
  %v258 = vlaneseq
  %v259 = vshrl.u32 %v258, 7
  %v260 = vsub.s32 0, %v259
  %v261 = vrot.slane %v256, %v260
  %v262 = vlaneseq
  %v263 = vshrl.u32 %v262, 7
  %v264 = vsub.s32 1, %v263
  %v265 = vrot.slane %v256, %v264
  %v332 = vunpack.c.l.b16 %v192
  %v333 = vunpack.c.h.b16 %v192
  %v334 = vunpack.c.l.b16 %v193
  %v335 = vunpack.c.h.b16 %v193
  %v336 = vunpack.c.l.b16 %v194
  %v337 = vunpack.c.h.b16 %v194
  %v338 = vunpack.c.l.b16 %v195
  %v339 = vunpack.c.h.b16 %v195
  %v340 = vunpack.c.l.b16 %v196
  %v341 = vunpack.c.h.b16 %v196
  %v342 = vunpack.c.l.b16 %v197
  %v343 = vunpack.c.h.b16 %v197
  %v344 = vunpack.c.l.b16 %v198
  %v345 = vunpack.c.h.b16 %v198
  %v346 = vunpack.c.l.b16 %v199
  %v347 = vunpack.c.h.b16 %v199
  %v348 = vunpack.c.l.b16 %v200
  %v349 = vunpack.c.h.b16 %v200
  %v350 = vunpack.c.l.b16 %v201
  %v351 = vunpack.c.h.b16 %v201
  %v352 = vunpack.c.l.b16 %v202
  %v353 = vunpack.c.h.b16 %v202
  %v354 = vunpack.c.l.b16 %v203
  %v355 = vunpack.c.h.b16 %v203
  %v356 = vunpack.c.l.b16 %v204
  %v357 = vunpack.c.h.b16 %v204
  %v358 = vunpack.c.l.b16 %v205
  %v359 = vunpack.c.h.b16 %v205
  %v360 = vunpack.c.l.b16 %v206
  %v361 = vunpack.c.h.b16 %v206
  %v362 = vunpack.c.l.b16 %v207
  %v363 = vunpack.c.h.b16 %v207
  %v364 = vunpack.c.l.b16 %v208
  %v365 = vunpack.c.h.b16 %v208
  %v366 = vunpack.c.l.b16 %v209
  %v367 = vunpack.c.h.b16 %v209
  %v368 = vunpack.c.l.b16 %v210
  %v369 = vunpack.c.h.b16 %v210
  %v370 = vunpack.c.l.b16 %v211
  %v371 = vunpack.c.h.b16 %v211
  %v372 = vunpack.c.l.b16 %v212
  %v373 = vunpack.c.h.b16 %v212
  %v374 = vunpack.c.l.b16 %v213
  %v375 = vunpack.c.h.b16 %v213
  %v376 = vunpack.c.l.b16 %v214
  %v377 = vunpack.c.h.b16 %v214
  %v378 = vunpack.c.l.b16 %v215
  %v379 = vunpack.c.h.b16 %v215
  %v380 = vunpack.c.l.b16 %v216
  %v381 = vunpack.c.h.b16 %v216
  %v382 = vunpack.c.l.b16 %v217
  %v383 = vunpack.c.h.b16 %v217
  %v384 = vunpack.c.l.b16 %v218
  %v385 = vunpack.c.h.b16 %v218
  %v386 = vunpack.c.l.b16 %v219
  %v387 = vunpack.c.h.b16 %v219
  %v388 = vunpack.c.l.b16 %v220
  %v389 = vunpack.c.h.b16 %v220
  %v390 = vunpack.c.l.b16 %v221
  %v391 = vunpack.c.h.b16 %v221
  %v392 = vunpack.c.l.b16 %v222
  %v393 = vunpack.c.h.b16 %v222
  %v394 = vunpack.c.l.b16 %v223
  %v395 = vunpack.c.h.b16 %v223
  %v396 = vunpack.c.l.b16 %v224
  %v397 = vunpack.c.h.b16 %v224
  %v398 = vunpack.c.l.b16 %v225
  %v399 = vunpack.c.h.b16 %v225
  %v400 = vunpack.c.l.b16 %v226
  %v401 = vunpack.c.h.b16 %v226
  %v402 = vunpack.c.l.b16 %v227
  %v403 = vunpack.c.h.b16 %v227
  %v404 = vunpack.c.l.b16 %v228
  %v405 = vunpack.c.h.b16 %v228
  %v406 = vunpack.c.l.b16 %v229
  %v407 = vunpack.c.h.b16 %v229
  %v408 = vunpack.c.l.b16 %v230
  %v409 = vunpack.c.h.b16 %v230
  %v410 = vunpack.c.l.b16 %v231
  %v411 = vunpack.c.h.b16 %v231
  %v412 = vunpack.c.l.b16 %v232
  %v413 = vunpack.c.h.b16 %v232
  %v414 = vunpack.c.l.b16 %v233
  %v415 = vunpack.c.h.b16 %v233
  %v416 = vunpack.c.l.b16 %v234
  %v417 = vunpack.c.h.b16 %v234
  %v418 = vunpack.c.l.b16 %v235
  %v419 = vunpack.c.h.b16 %v235
  %v420 = vunpack.c.l.b16 %v236
  %v421 = vunpack.c.h.b16 %v236
  %v422 = vunpack.c.l.b16 %v237
  %v423 = vunpack.c.h.b16 %v237
  %v424 = vunpack.c.l.b16 %v238
  %v425 = vunpack.c.h.b16 %v238
  %v426 = vunpack.c.l.b16 %v239
  %v427 = vunpack.c.h.b16 %v239
  %v428 = vunpack.c.l.b16 %v240
  %v429 = vunpack.c.h.b16 %v240
  %v430 = vunpack.c.l.b16 %v241
  %v431 = vunpack.c.h.b16 %v241
  %v432 = vunpack.c.l.b16 %v242
  %v433 = vunpack.c.h.b16 %v242
  %v434 = vunpack.c.l.b16 %v243
  %v435 = vunpack.c.h.b16 %v243
  %v436 = vunpack.c.l.b16 %v244
  %v437 = vunpack.c.h.b16 %v244
  %v438 = vunpack.c.l.b16 %v245
  %v439 = vunpack.c.h.b16 %v245
  %v440 = vunpack.c.l.b16 %v246
  %v441 = vunpack.c.h.b16 %v246
  %v442 = vunpack.c.l.b16 %v247
  %v443 = vunpack.c.h.b16 %v247
  %v444 = vunpack.c.l.b16 %v248
  %v445 = vunpack.c.h.b16 %v248
  %v446 = vunpack.c.l.b16 %v249
  %v447 = vunpack.c.h.b16 %v249
  %v448 = vunpack.c.l.b16 %v250
  %v449 = vunpack.c.h.b16 %v250
  %v450 = vunpack.c.l.b16 %v251
  %v451 = vunpack.c.h.b16 %v251
  %v452 = vunpack.c.l.b16 %v252
  %v453 = vunpack.c.h.b16 %v252
  %v454 = vunpack.c.l.b16 %v253
  %v455 = vunpack.c.h.b16 %v253
  %v456 = vunpack.c.l.b16 %v254
  %v457 = vunpack.c.h.b16 %v254
  %v458 = vunpack.c.l.b16 %v255
  %v459 = vunpack.c.h.b16 %v255
  %v460 = vpack.c.b16 %v334, %v332
  %v461 = vpack.c.b16 %v335, %v333
  %v462 = vpack.c.b16 %v338, %v336
  %v463 = vpack.c.b16 %v339, %v337
  %v464 = vpack.c.b16 %v342, %v340
  %v465 = vpack.c.b16 %v343, %v341
  %v466 = vpack.c.b16 %v346, %v344
  %v467 = vpack.c.b16 %v347, %v345
  %v468 = vpack.c.b16 %v350, %v348
  %v469 = vpack.c.b16 %v351, %v349
  %v470 = vpack.c.b16 %v354, %v352
  %v471 = vpack.c.b16 %v355, %v353
  %v472 = vpack.c.b16 %v358, %v356
  %v473 = vpack.c.b16 %v359, %v357
  %v474 = vpack.c.b16 %v362, %v360
  %v475 = vpack.c.b16 %v363, %v361
  %v476 = vpack.c.b16 %v366, %v364
  %v477 = vpack.c.b16 %v367, %v365
  %v478 = vpack.c.b16 %v370, %v368
  %v479 = vpack.c.b16 %v371, %v369
  %v480 = vpack.c.b16 %v374, %v372
  %v481 = vpack.c.b16 %v375, %v373
  %v482 = vpack.c.b16 %v378, %v376
  %v483 = vpack.c.b16 %v379, %v377
  %v484 = vpack.c.b16 %v382, %v380
  %v485 = vpack.c.b16 %v383, %v381
  %v486 = vpack.c.b16 %v386, %v384
  %v487 = vpack.c.b16 %v387, %v385
  %v488 = vpack.c.b16 %v390, %v388
  %v489 = vpack.c.b16 %v391, %v389
  %v490 = vpack.c.b16 %v394, %v392
  %v491 = vpack.c.b16 %v395, %v393
  %v492 = vpack.c.b16 %v398, %v396
  %v493 = vpack.c.b16 %v399, %v397
  %v494 = vpack.c.b16 %v402, %v400
  %v495 = vpack.c.b16 %v403, %v401
  %v496 = vpack.c.b16 %v406, %v404
  %v497 = vpack.c.b16 %v407, %v405
  %v498 = vpack.c.b16 %v410, %v408
  %v499 = vpack.c.b16 %v411, %v409
  %v500 = vpack.c.b16 %v414, %v412
  %v501 = vpack.c.b16 %v415, %v413
  %v502 = vpack.c.b16 %v418, %v416
  %v503 = vpack.c.b16 %v419, %v417
  %v504 = vpack.c.b16 %v422, %v420
  %v505 = vpack.c.b16 %v423, %v421
  %v506 = vpack.c.b16 %v426, %v424
  %v507 = vpack.c.b16 %v427, %v425
  %v508 = vpack.c.b16 %v430, %v428
  %v509 = vpack.c.b16 %v431, %v429
  %v510 = vpack.c.b16 %v434, %v432
  %v511 = vpack.c.b16 %v435, %v433
  %v512 = vpack.c.b16 %v438, %v436
  %v513 = vpack.c.b16 %v439, %v437
  %v514 = vpack.c.b16 %v442, %v440
  %v515 = vpack.c.b16 %v443, %v441
  %v516 = vpack.c.b16 %v446, %v444
  %v517 = vpack.c.b16 %v447, %v445
  %v518 = vpack.c.b16 %v450, %v448
  %v519 = vpack.c.b16 %v451, %v449
  %v520 = vpack.c.b16 %v454, %v452
  %v521 = vpack.c.b16 %v455, %v453
  %v522 = vpack.c.b16 %v458, %v456
  %v523 = vpack.c.b16 %v459, %v457
  %588 = vmatprep.subr.bf16.mxu0 %v475
  %589 = vmatpush1.bf16.msra.mxu0 %v474
  %590 = vmatprep.subr.bf16.mxu0 %v473
  %591 = vmatpush1.bf16.msra.mxu0 %v472
  %592 = vmatprep.subr.bf16.mxu0 %v471
  %593 = vmatpush1.bf16.msra.mxu0 %v470
  %594 = vmatprep.subr.bf16.mxu0 %v469
  %595 = vmatpush1.bf16.msra.mxu0 %v468
  %596 = vmatprep.subr.bf16.mxu0 %v467
  %597 = vmatpush1.bf16.msra.mxu0 %v466
  %598 = vmatprep.subr.bf16.mxu0 %v465
  %599 = vmatpush1.bf16.msra.mxu0 %v464
  %600 = vmatprep.subr.bf16.mxu0 %v463
  %601 = vmatpush1.bf16.msra.mxu0 %v462
  %602 = vmatprep.subr.bf16.mxu0 %v461
  %603 = vmatpush1.bf16.msra.mxu0 %v460
  %604 = vmatprep.subr.bf16.mxu0 %v491
  %605 = vmatpush2.bf16.msra.mxu0 %v490
  %606 = vmatprep.subr.bf16.mxu0 %v489
  %607 = vmatpush2.bf16.msra.mxu0 %v488
  %608 = vmatprep.subr.bf16.mxu0 %v487
  %609 = vmatpush2.bf16.msra.mxu0 %v486
  %610 = vmatprep.subr.bf16.mxu0 %v485
  %611 = vmatpush2.bf16.msra.mxu0 %v484
  %612 = vmatprep.subr.bf16.mxu0 %v483
  %613 = vmatpush2.bf16.msra.mxu0 %v482
  %614 = vmatprep.subr.bf16.mxu0 %v481
  %615 = vmatpush2.bf16.msra.mxu0 %v480
  %616 = vmatprep.subr.bf16.mxu0 %v479
  %617 = vmatpush2.bf16.msra.mxu0 %v478
  %618 = vmatprep.subr.bf16.mxu0 %v477
  %619 = vmatpush2.bf16.msra.mxu0 %v476
  %620 = vmatprep.mubr.bf16.mxu0 %v189
  %621 = vmatmul.mubr.bf16.gmra.mxu0 %v188
  %v622 = vpop.f32.mrf.mxu0
  %v623 = vadd.f32 %v261, %v622
  %v624 = vpop.f32.mrf.mxu0
  %v625 = vadd.f32 %v265, %v624
  %v626 = vpop.f32.mrf.mxu0
  %v627 = vpop.f32.mrf.mxu0
  %628 = vdwg.mxu0
  %629 = vmatprep.subr.bf16.mxu0 %v507
  %630 = vmatpush1.bf16.msra.mxu0 %v506
  %631 = vmatprep.subr.bf16.mxu0 %v505
  %632 = vmatpush1.bf16.msra.mxu0 %v504
  %633 = vmatprep.subr.bf16.mxu0 %v503
  %634 = vmatpush1.bf16.msra.mxu0 %v502
  %635 = vmatprep.subr.bf16.mxu0 %v501
  %636 = vmatpush1.bf16.msra.mxu0 %v500
  %637 = vmatprep.subr.bf16.mxu0 %v499
  %638 = vmatpush1.bf16.msra.mxu0 %v498
  %639 = vmatprep.subr.bf16.mxu0 %v497
  %640 = vmatpush1.bf16.msra.mxu0 %v496
  %641 = vmatprep.subr.bf16.mxu0 %v495
  %642 = vmatpush1.bf16.msra.mxu0 %v494
  %643 = vmatprep.subr.bf16.mxu0 %v493
  %644 = vmatpush1.bf16.msra.mxu0 %v492
  %645 = vmatprep.subr.bf16.mxu0 %v523
  %646 = vmatpush2.bf16.msra.mxu0 %v522
  %647 = vmatprep.subr.bf16.mxu0 %v521
  %648 = vmatpush2.bf16.msra.mxu0 %v520
  %649 = vmatprep.subr.bf16.mxu0 %v519
  %650 = vmatpush2.bf16.msra.mxu0 %v518
  %651 = vmatprep.subr.bf16.mxu0 %v517
  %652 = vmatpush2.bf16.msra.mxu0 %v516
  %653 = vmatprep.subr.bf16.mxu0 %v515
  %654 = vmatpush2.bf16.msra.mxu0 %v514
  %655 = vmatprep.subr.bf16.mxu0 %v513
  %656 = vmatpush2.bf16.msra.mxu0 %v512
  %657 = vmatprep.subr.bf16.mxu0 %v511
  %658 = vmatpush2.bf16.msra.mxu0 %v510
  %659 = vmatprep.subr.bf16.mxu0 %v509
  %660 = vmatpush2.bf16.msra.mxu0 %v508
  %661 = vmatprep.mubr.bf16.mxu0 %v191
  %662 = vmatmul.mubr.bf16.gmra.mxu0 %v190
  %v663 = vpop.f32.mrf.mxu0
  %v664 = vadd.f32 %v623, %v663
  %v665 = vpop.f32.mrf.mxu0
  %v666 = vadd.f32 %v625, %v665
  %v667 = vpop.f32.mrf.mxu0
  %v668 = vpop.f32.mrf.mxu0
  %669 = vdwg.mxu0
  %v670 = vmax.f32 %v664, 0.0
  %v671 = vmax.f32 %v666, 0.0
  %v672 = vpack.c.bf16 %v670, %v670
  %v673 = vpack.c.bf16 %v671, %v671
  %v674 = vld [vmem:[%s5] sm:$0xf]
  %v675 = vld [vmem:[%s5 + $0x4] sm:$0xf]
  %v676 = vld [vmem:[%s5 + $0x8] sm:$0xf]
  %v677 = vld [vmem:[%s5 + $0xc] sm:$0xf]
  %v678 = vld [vmem:[%s5 + $0x10] sm:$0xf]
  %v679 = vld [vmem:[%s5 + $0x14] sm:$0xf]
  %v680 = vld [vmem:[%s5 + $0x18] sm:$0xf]
  %v681 = vld [vmem:[%s5 + $0x1c] sm:$0xf]
  %v682 = vld [vmem:[%s5 + $0x20] sm:$0xf]
  %v683 = vld [vmem:[%s5 + $0x24] sm:$0xf]
  %v684 = vld [vmem:[%s5 + $0x28] sm:$0xf]
  %v685 = vld [vmem:[%s5 + $0x2c] sm:$0xf]
  %v686 = vld [vmem:[%s5 + $0x30] sm:$0xf]
  %v687 = vld [vmem:[%s5 + $0x34] sm:$0xf]
  %v688 = vld [vmem:[%s5 + $0x38] sm:$0xf]
  %v689 = vld [vmem:[%s5 + $0x3c] sm:$0xf]
  %v690 = vld [vmem:[%s5 + $0x40] sm:$0xf]
  %v691 = vld [vmem:[%s5 + $0x44] sm:$0xf]
  %v692 = vld [vmem:[%s5 + $0x48] sm:$0xf]
  %v693 = vld [vmem:[%s5 + $0x4c] sm:$0xf]
  %v694 = vld [vmem:[%s5 + $0x50] sm:$0xf]
  %v695 = vld [vmem:[%s5 + $0x54] sm:$0xf]
  %v696 = vld [vmem:[%s5 + $0x58] sm:$0xf]
  %v697 = vld [vmem:[%s5 + $0x5c] sm:$0xf]
  %v698 = vld [vmem:[%s5 + $0x60] sm:$0xf]
  %v699 = vld [vmem:[%s5 + $0x64] sm:$0xf]
  %v700 = vld [vmem:[%s5 + $0x68] sm:$0xf]
  %v701 = vld [vmem:[%s5 + $0x6c] sm:$0xf]
  %v702 = vld [vmem:[%s5 + $0x70] sm:$0xf]
  %v703 = vld [vmem:[%s5 + $0x74] sm:$0xf]
  %v704 = vld [vmem:[%s5 + $0x78] sm:$0xf]
  %v705 = vld [vmem:[%s5 + $0x7c] sm:$0xf]
  %v706 = vld [vmem:[%s6] sm:$0x1]
  %v708 = vlaneseq
  %v709 = vshrl.u32 %v708, 7
  %v710 = vsub.s32 0, %v709
  %v711 = vrot.slane %v706, %v710
  %v745 = vunpack.c.l.b16 %v674
  %v746 = vunpack.c.l.b16 %v675
  %v747 = vunpack.c.l.b16 %v676
  %v748 = vunpack.c.l.b16 %v677
  %v749 = vunpack.c.l.b16 %v678
  %v750 = vunpack.c.l.b16 %v679
  %v751 = vunpack.c.l.b16 %v680
  %v752 = vunpack.c.l.b16 %v681
  %v753 = vunpack.c.l.b16 %v682
  %v754 = vunpack.c.l.b16 %v683
  %v755 = vunpack.c.l.b16 %v684
  %v756 = vunpack.c.l.b16 %v685
  %v757 = vunpack.c.l.b16 %v686
  %v758 = vunpack.c.l.b16 %v687
  %v759 = vunpack.c.l.b16 %v688
  %v760 = vunpack.c.l.b16 %v689
  %v761 = vunpack.c.l.b16 %v690
  %v762 = vunpack.c.l.b16 %v691
  %v763 = vunpack.c.l.b16 %v692
  %v764 = vunpack.c.l.b16 %v693
  %v765 = vunpack.c.l.b16 %v694
  %v766 = vunpack.c.l.b16 %v695
  %v767 = vunpack.c.l.b16 %v696
  %v768 = vunpack.c.l.b16 %v697
  %v769 = vunpack.c.l.b16 %v698
  %v770 = vunpack.c.l.b16 %v699
  %v771 = vunpack.c.l.b16 %v700
  %v772 = vunpack.c.l.b16 %v701
  %v773 = vunpack.c.l.b16 %v702
  %v774 = vunpack.c.l.b16 %v703
  %v775 = vunpack.c.l.b16 %v704
  %v776 = vunpack.c.l.b16 %v705
  %v777 = vpack.c.b16 %v746, %v745
  %v778 = vpack.c.b16 %v748, %v747
  %v779 = vpack.c.b16 %v750, %v749
  %v780 = vpack.c.b16 %v752, %v751
  %v781 = vpack.c.b16 %v754, %v753
  %v782 = vpack.c.b16 %v756, %v755
  %v783 = vpack.c.b16 %v758, %v757
  %v784 = vpack.c.b16 %v760, %v759
  %v785 = vpack.c.b16 %v762, %v761
  %v786 = vpack.c.b16 %v764, %v763
  %v787 = vpack.c.b16 %v766, %v765
  %v788 = vpack.c.b16 %v768, %v767
  %v789 = vpack.c.b16 %v770, %v769
  %v790 = vpack.c.b16 %v772, %v771
  %v791 = vpack.c.b16 %v774, %v773
  %v792 = vpack.c.b16 %v776, %v775
  %809 = vmatprep.subr.bf16.mxu0 0
  %810 = vmatpush1.bf16.msra.mxu0 %v784
  %811 = vmatprep.subr.bf16.mxu0 0
  %812 = vmatpush1.bf16.msra.mxu0 %v783
  %813 = vmatprep.subr.bf16.mxu0 0
  %814 = vmatpush1.bf16.msra.mxu0 %v782
  %815 = vmatprep.subr.bf16.mxu0 0
  %816 = vmatpush1.bf16.msra.mxu0 %v781
  %817 = vmatprep.subr.bf16.mxu0 0
  %818 = vmatpush1.bf16.msra.mxu0 %v780
  %819 = vmatprep.subr.bf16.mxu0 0
  %820 = vmatpush1.bf16.msra.mxu0 %v779
  %821 = vmatprep.subr.bf16.mxu0 0
  %822 = vmatpush1.bf16.msra.mxu0 %v778
  %823 = vmatprep.subr.bf16.mxu0 0
  %824 = vmatpush1.bf16.msra.mxu0 %v777
  %825 = vmatprep.subr.bf16.mxu0 0
  %826 = vmatpush2.bf16.msra.mxu0 %v792
  %827 = vmatprep.subr.bf16.mxu0 0
  %828 = vmatpush2.bf16.msra.mxu0 %v791
  %829 = vmatprep.subr.bf16.mxu0 0
  %830 = vmatpush2.bf16.msra.mxu0 %v790
  %831 = vmatprep.subr.bf16.mxu0 0
  %832 = vmatpush2.bf16.msra.mxu0 %v789
  %833 = vmatprep.subr.bf16.mxu0 0
  %834 = vmatpush2.bf16.msra.mxu0 %v788
  %835 = vmatprep.subr.bf16.mxu0 0
  %836 = vmatpush2.bf16.msra.mxu0 %v787
  %837 = vmatprep.subr.bf16.mxu0 0
  %838 = vmatpush2.bf16.msra.mxu0 %v786
  %839 = vmatprep.subr.bf16.mxu0 0
  %840 = vmatpush2.bf16.msra.mxu0 %v785
  %841 = vmatprep.mubr.bf16.mxu0 %v673
  %842 = vmatmul.mubr.bf16.gmra.mxu0 %v672
  %v843 = vpop.f32.mrf.mxu0
  %v844 = vadd.f32 %v711, %v843
  %v845 = vpop.f32.mrf.mxu0
  %v846 = vpop.f32.mrf.mxu0
  %v847 = vpop.f32.mrf.mxu0
  %848 = vdwg.mxu0
  %849 = vst [vmem:[%s7] sm:$0xff] %v844
  // Predicated region
  $region30: #{punish_model_forward.1} parent=0 // pred_check
    _
  $region31: #{punish_model_forward.1} parent=0 // pred_check_branch
    %851 = sbr.rel (0) target = $region33
  $region32: #{punish_model_forward.1} parent=0 // pred_region
    _
  $region33: #{punish_model_forward.1} parent=0 // pred_fallthru
    _
  // Predicated region
  $region34: #{punish_model_forward.1} parent=0 // pred_check
    _
  $region35: #{punish_model_forward.1} parent=0 // pred_check_branch
    %853 = sbr.rel (0) target = $region37
  $region36: #{punish_model_forward.1} parent=0 // pred_region
    _
  $region37: #{punish_model_forward.1} parent=0 // pred_fallthru
    _

</llo_original>
